<compile_context>
chip_gen: v7x
topology: tpu7x:2x2x1
jax: 0.10.0
libtpu: 0.0.40
codegen_flags: <defaults>
</compile_context>

<pallas_src>
import math

import jax
import jax.numpy as jnp
from jax.experimental import pallas as pl
from jax.experimental.pallas import tpu as pltpu

SUBLANE = 8


def _round_up(n, m):
    return ((n + m - 1) // m) * m


def _hypernet_kernel(x_ref, w1_ref, b1_ref, w2_ref, b2_ref, o_ref):
    # x_ref : (tm, input_dim)          VMEM
    # w1_ref: (input_dim, hidden_dim)  VMEM  (W1 pre-transposed)
    # b1_ref: (1, hidden_dim)          VMEM
    # w2_ref: (hidden_dim, output_dim) VMEM  (W2 pre-transposed)
    # b2_ref: (1, output_dim)          VMEM
    # o_ref : (tm, output_dim)         VMEM
    x = x_ref[...].astype(jnp.float32)
    h = jnp.dot(x, w1_ref[...].astype(jnp.float32),
                preferred_element_type=jnp.float32)
    h = jnp.maximum(h + b1_ref[...].astype(jnp.float32), 0.0)
    # Dropout: identity in eval-mode forward (see TODO at top of file).
    y = jnp.dot(h, w2_ref[...].astype(jnp.float32),
                preferred_element_type=jnp.float32)
    y = y + b2_ref[...].astype(jnp.float32)
    o_ref[...] = y.astype(o_ref.dtype)


def hypernetwork_forward(x, w1, b1, w2, b2, *, tm=512):
    """Fused Linear -> ReLU -> (Dropout=id) -> Linear.

    x : (..., input_dim)
    w1: (hidden_dim, input_dim)   b1: (hidden_dim,)   (PyTorch nn.Linear layout)
    w2: (output_dim, hidden_dim)  b2: (output_dim,)
    returns (..., output_dim) in x.dtype
    """
    orig_shape = x.shape
    out_dtype = x.dtype
    input_dim = orig_shape[-1]
    hidden_dim = w1.shape[0]
    output_dim = w2.shape[0]

    rows = 1
    for d in orig_shape[:-1]:
        rows *= d
    x2 = x.reshape(rows, input_dim)

    # Large row tile (amortizes per-step pipeline overhead), clamped to the
    # problem size and kept a multiple of the 8-row sublane tile.
    tm = max(SUBLANE, min(tm, _round_up(rows, SUBLANE)))
    tm = _round_up(tm, SUBLANE)
    padded_rows = _round_up(rows, tm)
    if padded_rows != rows:
        x2 = jnp.pad(x2, ((0, padded_rows - rows), (0, 0)))

    # One-time tiny transposes so the kernel does plain row-major matmuls.
    w1t = jnp.transpose(w1)                     # (input_dim, hidden_dim)
    w2t = jnp.transpose(w2)                     # (hidden_dim, output_dim)
    b1r = b1.reshape(1, hidden_dim)
    b2r = b2.reshape(1, output_dim)

    out = pl.pallas_call(
        _hypernet_kernel,
        out_shape=jax.ShapeDtypeStruct((padded_rows, output_dim), out_dtype),
        grid_spec=pltpu.PrefetchScalarGridSpec(
            num_scalar_prefetch=0,
            grid=(padded_rows // tm,),
            in_specs=[
                pl.BlockSpec((tm, input_dim), lambda i: (i, 0)),
                pl.BlockSpec((input_dim, hidden_dim), lambda i: (0, 0)),
                pl.BlockSpec((1, hidden_dim), lambda i: (0, 0)),
                pl.BlockSpec((hidden_dim, output_dim), lambda i: (0, 0)),
                pl.BlockSpec((1, output_dim), lambda i: (0, 0)),
            ],
            out_specs=pl.BlockSpec((tm, output_dim), lambda i: (i, 0)),
        ),
        compiler_params=pltpu.CompilerParams(
            dimension_semantics=("parallel",),
            vmem_limit_bytes=40 << 20,
        ),
    )(x2, w1t, b1r, w2t, b2r)

    if padded_rows != rows:
        out = out[:rows]
    return out.reshape(*orig_shape[:-1], output_dim)


class HyperNetworkPallas:
    """Deterministic (eval-mode) re-implementation of the PyTorch module."""

    def __init__(self, input_dim, hidden_dim, output_dim, dropout_hyper=0.0,
                 *, key=None, dtype=jnp.float32):
        if key is None:
            key = jax.random.PRNGKey(0)
        k1, k2 = jax.random.split(key)
        # xavier_normal_ (gain=1): std = sqrt(2 / (fan_in + fan_out)); bias = 0.
        std1 = math.sqrt(2.0 / (input_dim + hidden_dim))
        std2 = math.sqrt(2.0 / (hidden_dim + output_dim))
        self.w1 = (std1 * jax.random.normal(k1, (hidden_dim, input_dim),
                                            dtype=jnp.float32)).astype(dtype)
        self.b1 = jnp.zeros((hidden_dim,), dtype)
        self.w2 = (std2 * jax.random.normal(k2, (output_dim, hidden_dim),
                                            dtype=jnp.float32)).astype(dtype)
        self.b2 = jnp.zeros((output_dim,), dtype)
        self.dropout_hyper = dropout_hyper  # eval-mode: identity

    def __call__(self, x):
        return hypernetwork_forward(x, self.w1, self.b1, self.w2, self.b2)


if __name__ == "__main__":
    key = jax.random.PRNGKey(0)
    kx, kp = jax.random.split(key)

    # Small shapes implied by the module: batch-like leading dims (2, 4),
    # input_dim=16, hidden_dim=32, output_dim=8.
    x = jax.random.normal(kx, (2, 4, 16), dtype=jnp.float32)
    net = HyperNetworkPallas(input_dim=16, hidden_dim=32, output_dim=8,
                             dropout_hyper=0.1, key=kp)

    out = jax.block_until_ready(net(x))

    # Pure-JAX reference (eval-mode forward: Dropout is identity).
    h_ref = jnp.maximum(x @ net.w1.T + net.b1, 0.0)
    ref = h_ref @ net.w2.T + net.b2

    assert out.shape == (2, 4, 8), out.shape
    assert jnp.allclose(out, ref, atol=1e-5, rtol=1e-5), "mismatch vs reference"

    print("KERNEL_OK")
</pallas_src>

<mosaic_0001>
module attributes {stable_mosaic.version = 11 : i64} {
  func.func @_hypernet_kernel(%arg0: i32, %arg1: memref<8x16xf32, #tpu.memory_space<vmem>>, %arg2: memref<16x32xf32, #tpu.memory_space<vmem>>, %arg3: memref<1x32xf32, #tpu.memory_space<vmem>>, %arg4: memref<32x8xf32, #tpu.memory_space<vmem>>, %arg5: memref<1x8xf32, #tpu.memory_space<vmem>>, %arg6: memref<8x8xf32, #tpu.memory_space<vmem>>) attributes {dimension_semantics = [#tpu.dimension_semantics<parallel>], iteration_bounds = array<i64: 1>, scalar_prefetch = 0 : i64, scratch_operands = 0 : i64, tpu.core_type = #tpu.core_type<tc>, window_params = [{transform_indices = @transform_0, window_bounds = array<i64: 8, 16>}, {pipeline_mode = #tpu.pipeline_mode<synchronous>, transform_indices = @transform_1, window_bounds = array<i64: 16, 32>}, {pipeline_mode = #tpu.pipeline_mode<synchronous>, transform_indices = @transform_2, window_bounds = array<i64: 1, 32>}, {pipeline_mode = #tpu.pipeline_mode<synchronous>, transform_indices = @transform_3, window_bounds = array<i64: 32, 8>}, {pipeline_mode = #tpu.pipeline_mode<synchronous>, transform_indices = @transform_4, window_bounds = array<i64: 1, 8>}, {transform_indices = @transform_5, window_bounds = array<i64: 8, 8>}]} {
    %c0 = arith.constant 0 : index
    %c0_0 = arith.constant 0 : index
    %0 = vector.load %arg1[%c0, %c0_0] : memref<8x16xf32, #tpu.memory_space<vmem>>, vector<8x16xf32>
    %c0_1 = arith.constant 0 : index
    %c0_2 = arith.constant 0 : index
    %1 = vector.load %arg2[%c0_1, %c0_2] : memref<16x32xf32, #tpu.memory_space<vmem>>, vector<16x32xf32>
    %cst = arith.constant dense<0.000000e+00> : vector<8x32xf32>
    %2 = tpu.matmul %0, %1, %cst {dimension_numbers = #tpu.dot_dimension_numbers<[1], [0], [0], [1], [0, 0, 1, 1], [], []>} : vector<8x16xf32>, vector<16x32xf32>, vector<8x32xf32> -> vector<8x32xf32>
    %c0_3 = arith.constant 0 : index
    %c0_4 = arith.constant 0 : index
    %3 = vector.load %arg3[%c0_3, %c0_4] : memref<1x32xf32, #tpu.memory_space<vmem>>, vector<1x32xf32>
    %4 = vector.broadcast %3 : vector<1x32xf32> to vector<8x32xf32>
    %5 = arith.addf %2, %4 : vector<8x32xf32>
    %cst_5 = arith.constant 0.000000e+00 : f32
    %6 = vector.broadcast %cst_5 : f32 to vector<8x32xf32>
    %7 = arith.maximumf %5, %6 : vector<8x32xf32>
    %c0_6 = arith.constant 0 : index
    %c0_7 = arith.constant 0 : index
    %8 = vector.load %arg4[%c0_6, %c0_7] : memref<32x8xf32, #tpu.memory_space<vmem>>, vector<32x8xf32>
    %cst_8 = arith.constant dense<0.000000e+00> : vector<8x8xf32>
    %9 = tpu.matmul %7, %8, %cst_8 {dimension_numbers = #tpu.dot_dimension_numbers<[1], [0], [0], [1], [0, 0, 1, 1], [], []>} : vector<8x32xf32>, vector<32x8xf32>, vector<8x8xf32> -> vector<8x8xf32>
    %c0_9 = arith.constant 0 : index
    %c0_10 = arith.constant 0 : index
    %10 = vector.load %arg5[%c0_9, %c0_10] : memref<1x8xf32, #tpu.memory_space<vmem>>, vector<1x8xf32>
    %11 = vector.broadcast %10 : vector<1x8xf32> to vector<8x8xf32>
    %12 = arith.addf %9, %11 : vector<8x8xf32>
    %c0_11 = arith.constant 0 : index
    %c0_12 = arith.constant 0 : index
    %13 = vector.load %arg6[%c0_11, %c0_12] : memref<8x8xf32, #tpu.memory_space<vmem>>, vector<8x8xf32>
    tpu.vector_store %arg6[%c0_11, %c0_12], %12 {strides = array<i32>} : memref<8x8xf32, #tpu.memory_space<vmem>>, vector<8x8xf32>,
    return
  }
  func.func @transform_0(%arg0: i32) -> (i32, i32) {
    %c0_i32 = arith.constant 0 : i32
    %c0_i32_0 = arith.constant 0 : i32
    return %arg0, %c0_i32 : i32, i32
  }
  func.func @transform_1(%arg0: i32) -> (i32, i32) {
    %c0_i32 = arith.constant 0 : i32
    %c0_i32_0 = arith.constant 0 : i32
    %c0_i32_1 = arith.constant 0 : i32
    return %c0_i32, %c0_i32_0 : i32, i32
  }
  func.func @transform_2(%arg0: i32) -> (i32, i32) {
    %c0_i32 = arith.constant 0 : i32
    %c0_i32_0 = arith.constant 0 : i32
    %c0_i32_1 = arith.constant 0 : i32
    return %c0_i32, %c0_i32_0 : i32, i32
  }
  func.func @transform_3(%arg0: i32) -> (i32, i32) {
    %c0_i32 = arith.constant 0 : i32
    %c0_i32_0 = arith.constant 0 : i32
    %c0_i32_1 = arith.constant 0 : i32
    return %c0_i32, %c0_i32_0 : i32, i32
  }
  func.func @transform_4(%arg0: i32) -> (i32, i32) {
    %c0_i32 = arith.constant 0 : i32
    %c0_i32_0 = arith.constant 0 : i32
    %c0_i32_1 = arith.constant 0 : i32
    return %c0_i32, %c0_i32_0 : i32, i32
  }
  func.func @transform_5(%arg0: i32) -> (i32, i32) {
    %c0_i32 = arith.constant 0 : i32
    %c0_i32_0 = arith.constant 0 : i32
    return %arg0, %c0_i32 : i32, i32
  }
}

</mosaic_0001>

<llo_original>
// kernel: tpu_custom_call.1
$region0: #{tpu_custom_call.1}
  #allocation0 [shape = 'u32[]', space=smem, size = 0x4, offset = 0x4, fixed_abs, tag = 'smem constant byte address 0x4 - core index']
  #allocation1 [shape = 'u32[144,128]{1,0:T(1,128)}', space=vmem, size = 0x12000, scoped, tag = 'internal scratch']
  %s0 = inlined_call_operand.vmem [shape: f32[8,16], index: 0, kind: input, shape index: {}]
  %s1 = inlined_call_operand.vmem [shape: f32[16,32], index: 1, kind: input, shape index: {}]
  %s2 = inlined_call_operand.vmem [shape: f32[1,32], index: 2, kind: input, shape index: {}]
  %s3 = inlined_call_operand.vmem [shape: f32[32,8], index: 3, kind: input, shape index: {}]
  %s4 = inlined_call_operand.vmem [shape: f32[1,8], index: 4, kind: input, shape index: {}]
  %s5 = inlined_call_operand.hbm [shape: f32[8,8], index: 5, kind: output, shape index: {}]
  %s6 = sld [smem:[#allocation0]]
  $region30: #{tpu_custom_call.1} parent=0
    _
  %s8 = ssub.s32 1, %s6
  %s9 = scalar_select 0, %s8, %s6
  $region1: #{tpu_custom_call.1} parent=0
    #allocation2 [shape = 'u8[4096]{0}', space=vmem, size = 0x1000, scoped, tag = 'output window, operand 0, single buffered']
    #allocation3 [shape = 's32[1]{0}', space=sflag, size = 0x4, scoped, tag = 'scoped memory for tpu_custom_call.1']
    %10 = vsyncpa [#allocation3], 0
    // Predicated region
    $region2: #{tpu_custom_call.1} parent=1 // pred_check
      _
    $region3: #{tpu_custom_call.1} parent=1 // pred_check_branch
      %12 = sbr.rel (0) target = $region5
    $region4: #{tpu_custom_call.1} parent=1 // pred_region
      _
    $region5: #{tpu_custom_call.1} parent=1 // pred_fallthru
      _
    // Predicated region
    $region6: #{tpu_custom_call.1} parent=1 // pred_check
      _
    $region7: #{tpu_custom_call.1} parent=1 // pred_check_branch
      %14 = sbr.rel (0) target = $region9
    $region8: #{tpu_custom_call.1} parent=1 // pred_region
      _
    $region9: #{tpu_custom_call.1} parent=1 // pred_fallthru
      _
    // Predicated region
    $region10: #{tpu_custom_call.1} parent=1 // pred_check
      _
    $region11: #{tpu_custom_call.1} parent=1 // pred_check_branch
      %16 = sbr.rel (0) target = $region13
    $region12: #{tpu_custom_call.1} parent=1 // pred_region
      _
    $region13: #{tpu_custom_call.1} parent=1 // pred_fallthru
      _
    // Predicated region
    $region14: #{tpu_custom_call.1} parent=1 // pred_check
      _
    $region15: #{tpu_custom_call.1} parent=1 // pred_check_branch
      %18 = sbr.rel (0) target = $region17
    $region16: #{tpu_custom_call.1} parent=1 // pred_region
      _
    $region17: #{tpu_custom_call.1} parent=1 // pred_fallthru
      _
    // Predicated region
    $region18: #{tpu_custom_call.1} parent=1 // pred_check
      _
    $region19: #{tpu_custom_call.1} parent=1 // pred_check_branch
      %20 = sbr.rel (0) target = $region21
    $region20: #{tpu_custom_call.1} parent=1 // pred_region
      _
    $region21: #{tpu_custom_call.1} parent=1 // pred_fallthru
      _
    %v21 = vld [vmem:[%s0] sm:$0xff]
    %v22 = vld [vmem:[%s1] sm:$0xff]
    %v23 = vld [vmem:[%s1 + $0x8] sm:$0xff]
    %v24 = vld [vmem:[%s2] sm:$0x1]
    %v26 = vlaneseq
    %v27 = vshrl.u32 %v26, 7
    %v28 = vsub.s32 0, %v27
    %v29 = vrot.slane %v24, %v28
    %vm31 = vcmask 130048
    %v33 = vsel %vm31, %v21, 0
    %35 = vmatprep.subr.mxu0 0.0
    %36 = vmatpush1.msra.mxu0 %v22
    %37 = vmatprep.subr.mxu0 0.0
    %38 = vmatpush1.msra.mxu0 %v23
    %39 = vmatprep.subr.mxu0 0.0
    %40 = vmatpush1.msra.mxu0 0.0
    %41 = vmatprep.subr.mxu0 0.0
    %42 = vmatpush1.msra.mxu0 0.0
    %43 = vmatprep.subr.mxu0 0.0
    %44 = vmatpush1.msra.mxu0 0.0
    %45 = vmatprep.subr.mxu0 0.0
    %46 = vmatpush1.msra.mxu0 0.0
    %47 = vmatprep.subr.mxu0 0.0
    %48 = vmatpush1.msra.mxu0 0.0
    %49 = vmatprep.subr.mxu0 0.0
    %50 = vmatpush1.msra.mxu0 0.0
    %51 = vmatprep.subr.mxu0 0.0
    %52 = vmatpush1.msra.mxu0 0.0
    %53 = vmatprep.subr.mxu0 0.0
    %54 = vmatpush1.msra.mxu0 0.0
    %55 = vmatprep.subr.mxu0 0.0
    %56 = vmatpush1.msra.mxu0 0.0
    %57 = vmatprep.subr.mxu0 0.0
    %58 = vmatpush1.msra.mxu0 0.0
    %59 = vmatprep.subr.mxu0 0.0
    %60 = vmatpush1.msra.mxu0 0.0
    %61 = vmatprep.subr.mxu0 0.0
    %62 = vmatpush1.msra.mxu0 0.0
    %63 = vmatprep.subr.mxu0 0.0
    %64 = vmatpush1.msra.mxu0 0.0
    %65 = vmatprep.subr.mxu0 0.0
    %66 = vmatpush1.msra.mxu0 0.0
    %67 = vmatprep.subr.mxu0 0.0
    %68 = vmatpush1.msra.mxu0 0.0
    %69 = vmatprep.subr.mxu0 0.0
    %70 = vmatpush1.msra.mxu0 0.0
    %71 = vmatprep.subr.mxu0 0.0
    %72 = vmatpush1.msra.mxu0 0.0
    %73 = vmatprep.subr.mxu0 0.0
    %74 = vmatpush1.msra.mxu0 0.0
    %75 = vmatprep.subr.mxu0 0.0
    %76 = vmatpush1.msra.mxu0 0.0
    %77 = vmatprep.subr.mxu0 0.0
    %78 = vmatpush1.msra.mxu0 0.0
    %79 = vmatprep.subr.mxu0 0.0
    %80 = vmatpush1.msra.mxu0 0.0
    %81 = vmatprep.subr.mxu0 0.0
    %82 = vmatpush1.msra.mxu0 0.0
    %83 = vmatprep.subr.mxu0 0.0
    %84 = vmatpush1.msra.mxu0 0.0
    %85 = vmatprep.subr.mxu0 0.0
    %86 = vmatpush1.msra.mxu0 0.0
    %87 = vmatprep.subr.mxu0 0.0
    %88 = vmatpush1.msra.mxu0 0.0
    %89 = vmatprep.subr.mxu0 0.0
    %90 = vmatpush1.msra.mxu0 0.0
    %91 = vmatprep.subr.mxu0 0.0
    %92 = vmatpush1.msra.mxu0 0.0
    %93 = vmatprep.subr.mxu0 0.0
    %94 = vmatpush1.msra.mxu0 0.0
    %95 = vmatprep.subr.mxu0 0.0
    %96 = vmatpush1.msra.mxu0 0.0
    %97 = vmatprep.subr.mxu0 0.0
    %98 = vmatpush1.msra.mxu0 0.0
    %99 = vmatprep.mubr.f32.mxu0 0.0
    %100 = vmatmul.mubr.f32.gmra.mrb[0].mxu0 %v33
    %v101 = vpop.f32.mrb[0].mxu0
    %v102 = vadd.f32 %v29, %v101
    %v103 = vpop.f32.mrb[0].mxu0
    %104 = vdwg.mxu0
    %v105 = vmax.f32 %v102, 0.0
    %v106 = vld [vmem:[%s3] sm:$0xff]
    %v107 = vld [vmem:[%s3 + $0x8] sm:$0xff]
    %v108 = vld [vmem:[%s3 + $0x10] sm:$0xff]
    %v109 = vld [vmem:[%s3 + $0x18] sm:$0xff]
    %v110 = vld [vmem:[%s4] sm:$0x1]
    %v112 = vlaneseq
    %v113 = vshrl.u32 %v112, 7
    %v114 = vsub.s32 0, %v113
    %v115 = vrot.slane %v110, %v114
    %vm117 = vcmask 261120
    %v119 = vsel %vm117, %v105, 0
    %121 = vmatprep.subr.mxu0 0.0
    %122 = vmatpush1.msra.mxu0 %v106
    %123 = vmatprep.subr.mxu0 0.0
    %124 = vmatpush1.msra.mxu0 %v107
    %125 = vmatprep.subr.mxu0 0.0
    %126 = vmatpush1.msra.mxu0 %v108
    %127 = vmatprep.subr.mxu0 0.0
    %128 = vmatpush1.msra.mxu0 %v109
    %129 = vmatprep.subr.mxu0 0.0
    %130 = vmatpush1.msra.mxu0 0.0
    %131 = vmatprep.subr.mxu0 0.0
    %132 = vmatpush1.msra.mxu0 0.0
    %133 = vmatprep.subr.mxu0 0.0
    %134 = vmatpush1.msra.mxu0 0.0
    %135 = vmatprep.subr.mxu0 0.0
    %136 = vmatpush1.msra.mxu0 0.0
    %137 = vmatprep.subr.mxu0 0.0
    %138 = vmatpush1.msra.mxu0 0.0
    %139 = vmatprep.subr.mxu0 0.0
    %140 = vmatpush1.msra.mxu0 0.0
    %141 = vmatprep.subr.mxu0 0.0
    %142 = vmatpush1.msra.mxu0 0.0
    %143 = vmatprep.subr.mxu0 0.0
    %144 = vmatpush1.msra.mxu0 0.0
    %145 = vmatprep.subr.mxu0 0.0
    %146 = vmatpush1.msra.mxu0 0.0
    %147 = vmatprep.subr.mxu0 0.0
    %148 = vmatpush1.msra.mxu0 0.0
    %149 = vmatprep.subr.mxu0 0.0
    %150 = vmatpush1.msra.mxu0 0.0
    %151 = vmatprep.subr.mxu0 0.0
    %152 = vmatpush1.msra.mxu0 0.0
    %153 = vmatprep.subr.mxu0 0.0
    %154 = vmatpush1.msra.mxu0 0.0
    %155 = vmatprep.subr.mxu0 0.0
    %156 = vmatpush1.msra.mxu0 0.0
    %157 = vmatprep.subr.mxu0 0.0
    %158 = vmatpush1.msra.mxu0 0.0
    %159 = vmatprep.subr.mxu0 0.0
    %160 = vmatpush1.msra.mxu0 0.0
    %161 = vmatprep.subr.mxu0 0.0
    %162 = vmatpush1.msra.mxu0 0.0
    %163 = vmatprep.subr.mxu0 0.0
    %164 = vmatpush1.msra.mxu0 0.0
    %165 = vmatprep.subr.mxu0 0.0
    %166 = vmatpush1.msra.mxu0 0.0
    %167 = vmatprep.subr.mxu0 0.0
    %168 = vmatpush1.msra.mxu0 0.0
    %169 = vmatprep.subr.mxu0 0.0
    %170 = vmatpush1.msra.mxu0 0.0
    %171 = vmatprep.subr.mxu0 0.0
    %172 = vmatpush1.msra.mxu0 0.0
    %173 = vmatprep.subr.mxu0 0.0
    %174 = vmatpush1.msra.mxu0 0.0
    %175 = vmatprep.subr.mxu0 0.0
    %176 = vmatpush1.msra.mxu0 0.0
    %177 = vmatprep.subr.mxu0 0.0
    %178 = vmatpush1.msra.mxu0 0.0
    %179 = vmatprep.subr.mxu0 0.0
    %180 = vmatpush1.msra.mxu0 0.0
    %181 = vmatprep.subr.mxu0 0.0
    %182 = vmatpush1.msra.mxu0 0.0
    %183 = vmatprep.subr.mxu0 0.0
    %184 = vmatpush1.msra.mxu0 0.0
    %185 = vmatprep.mubr.f32.mxu0 0.0
    %186 = vmatmul.mubr.f32.gmra.mrb[0].mxu0 %v119
    %v187 = vpop.f32.mrb[0].mxu0
    %v188 = vadd.f32 %v115, %v187
    %v189 = vpop.f32.mrb[0].mxu0
    %190 = vdwg.mxu0
    %vm191 = vcmask 64512
    %192 = vst.msk [vmem:[#allocation2] sm:$0xff] %vm191, %v188
    // Predicated region
    $region22: #{tpu_custom_call.1} parent=1 // pred_check
      _
    $region23: #{tpu_custom_call.1} parent=1 // pred_check_branch
      %194 = sbr.rel (0) target = $region25
    $region24: #{tpu_custom_call.1} parent=1 // pred_region
      %s196 = ssub.s32 128, 128
      %197 = vsyncadd [#allocation3], %s196
      %s199 = sshll.u32 [#allocation2], 4
      %s200 = int_to_ptr.vmem [resolvable:$true] %s199
      %202 = dma.vmem_to_hbm [thread:$0]  %s200, 128, %s5, [#allocation3]
    $region25: #{tpu_custom_call.1} parent=1 // pred_fallthru
      _
    // Predicated region
    $region26: #{tpu_custom_call.1} parent=1 // pred_check
      _
    $region27: #{tpu_custom_call.1} parent=1 // pred_check_branch
      %204 = sbr.rel (0) target = $region29
    $region28: #{tpu_custom_call.1} parent=1 // pred_region
      %205 = dma.done [#allocation3], 128
    $region29: #{tpu_custom_call.1} parent=1 // pred_fallthru
      _
    %206 = vsyncpa [#allocation3], 1

</llo_original>
